<compile_context>
chip_gen: v5e
topology: v5e:2x2
jax: 0.10.0
libtpu: 0.0.40
codegen_flags: <defaults>
</compile_context>

<pallas_src>
import functools

import jax
import jax.numpy as jnp
from jax.experimental import pallas as pl
from jax.experimental.pallas import tpu as pltpu


def _layernorm_kernel(x_ref, alpha_ref, bias_ref, o_ref, *,
                      eps: float, features: int, masked: bool):
    # x_ref block: (tR, Fp); alpha/bias blocks: (1, Fp); Fp % 128 == 0.
    x = x_ref[...].astype(jnp.float32)                          # (tR, Fp)

    if masked:
        lane = jax.lax.broadcasted_iota(jnp.int32, x.shape, dimension=1)
        valid = lane < features
        xs = jnp.where(valid, x, jnp.float32(0.0))
    else:
        xs = x

    inv_n = jnp.float32(1.0 / features)
    mean = jnp.sum(xs, axis=-1, keepdims=True) * inv_n          # (tR, 1)

    d = x - mean
    if masked:
        d = jnp.where(valid, d, jnp.float32(0.0))

    # Two-pass (centered) variance, unbiased like torch.std (ddof=1).
    # features == 1 yields 0/0 -> NaN, matching torch semantics.
    var = jnp.sum(d * d, axis=-1, keepdims=True) / jnp.float32(features - 1)
    std = jnp.sqrt(var)

    # Exact divide. approx=True would lower to the EUP vrcp slot, but the
    # accuracy margin vs the 1e-5 tolerance is thin and this op acts on a
    # (tR, 1) vector, so it is not a performance lever either way.
    inv = pl.reciprocal(std + jnp.float32(eps), approx=False)

    alpha = alpha_ref[...]                                      # (1, Fp) f32
    bias = bias_ref[...]                                        # (1, Fp) f32
    o_ref[...] = (alpha * (d * inv) + bias).astype(o_ref.dtype)


def _row_tile(num_rows: int, features_padded: int) -> int:
    """Row-tile size: ~4 MiB f32 working set, multiple of 32, >= 2 grid steps."""
    budget_bytes = 4 * 1024 * 1024
    rows = budget_bytes // max(1, features_padded * 4)
    # Multiple of 32 covers f32 (8), bf16 (16) and int8/fp8 (32) sublane packing.
    rows = max(32, (rows // 32) * 32)

    if num_rows > 8:
        # Guarantee at least 2 grid steps (DMA/compute overlap + dual-TC
        # sharding on v7x): cap at ceil(R/2) rounded up to a sublane multiple.
        half = -(-(num_rows // 2) // 8) * 8
        rows = min(rows, max(8, half))
    else:
        # Tiny inputs: a single full block (full array dims are always legal).
        rows = num_rows
    return max(1, rows)


def _vmem_limit(tile_rows: int, features_padded: int,
                in_itemsize: int, out_itemsize: int) -> int:
    """Per-generation VMEM request: double-buffered in/out + f32 temps + headroom."""
    try:
        cap = int(pltpu.get_tpu_info().vmem_capacity_bytes)
    except Exception:  # pragma: no cover - conservative fallback (v7x-sized)
        cap = 64 * 1024 * 1024
    tile_elems = tile_rows * features_padded
    need = tile_elems * (2 * in_itemsize + 2 * out_itemsize + 3 * 4)
    need += 4 * 1024 * 1024                      # Mosaic internal scratch headroom
    ceiling = int(cap * 0.625)                   # ~40 MiB on v7x, ~80 MiB on v5e/v6e
    return int(min(max(need, 16 * 1024 * 1024), ceiling))


def pallas_layernorm(x, alpha, bias, eps: float = 1e-6):
    """LayerNormalization(features) forward; normalizes over the last axis."""
    orig_shape = x.shape
    F = orig_shape[-1]
    R = 1
    for d in orig_shape[:-1]:
        R *= d

    # Lane-dense output (F padded to a multiple of 128 -> unmasked vst).
    Fp = ((F + 127) // 128) * 128
    pad = Fp - F

    x2 = x.reshape(R, F)
    alpha2 = alpha.reshape(1, F).astype(jnp.float32)
    bias2 = bias.reshape(1, F).astype(jnp.float32)
    if pad:
        x2 = jnp.pad(x2, ((0, 0), (0, pad)))
        alpha2 = jnp.pad(alpha2, ((0, 0), (0, pad)))
        bias2 = jnp.pad(bias2, ((0, 0), (0, pad)))

    tR = _row_tile(R, Fp)
    grid = (pl.cdiv(R, tR),)
    vmem_limit = _vmem_limit(tR, Fp, x2.dtype.itemsize, x.dtype.itemsize)

    kernel = functools.partial(_layernorm_kernel, eps=float(eps),
                               features=F, masked=bool(pad))

    out2 = pl.pallas_call(
        kernel,
        out_shape=jax.ShapeDtypeStruct((R, Fp), x.dtype),
        grid=grid,
        in_specs=[
            pl.BlockSpec((tR, Fp), lambda i: (i, 0)),
            pl.BlockSpec((1, Fp), lambda i: (0, 0)),
            pl.BlockSpec((1, Fp), lambda i: (0, 0)),
        ],
        out_specs=pl.BlockSpec((tR, Fp), lambda i: (i, 0)),
        compiler_params=pltpu.CompilerParams(
            dimension_semantics=("parallel",),
            vmem_limit_bytes=vmem_limit,
        ),
    )(x2, alpha2, bias2)

    if pad:
        out2 = out2[:, :F]
    return out2.reshape(orig_shape)


class Decoder:
    """JAX/Pallas port of the PyTorch Decoder module."""

    def __init__(self, features: int, decoder_layers=()):
        self.features = features
        # Matches the PyTorch module init: alpha = ones, bias = ones.
        self.alpha = jnp.ones((features,), dtype=jnp.float32)
        self.bias = jnp.ones((features,), dtype=jnp.float32)
        self.eps = 1e-6
        self.decoder_layers = list(decoder_layers)

    def __call__(self, x, encoder_output, src_mask, tgt_mask):
        for layer in self.decoder_layers:
            x = layer(x, encoder_output, src_mask, tgt_mask)
        return pallas_layernorm(x, self.alpha, self.bias, self.eps)


def _reference_forward(x, alpha, bias, eps=1e-6):
    # Pure-JAX reference replicating PyTorch semantics (torch.std -> ddof=1).
    mean = jnp.mean(x, axis=-1, keepdims=True)
    std = jnp.std(x, axis=-1, keepdims=True, ddof=1)
    return alpha * (x - mean) / (std + eps) + bias


if __name__ == "__main__":
    # Lane-dense feature dim (multiple of 128); small demo shapes.
    B, S, F = 2, 8, 128  # batch, target seq len, model features
    key = jax.random.PRNGKey(0)
    kx, ke = jax.random.split(key)
    x = jax.random.normal(kx, (B, S, F), dtype=jnp.float32)
    encoder_output = jax.random.normal(ke, (B, S, F), dtype=jnp.float32)
    src_mask = jnp.ones((B, 1, 1, S), dtype=jnp.float32)
    tgt_mask = jnp.ones((B, 1, S, S), dtype=jnp.float32)

    decoder = Decoder(features=F, decoder_layers=())
    out = decoder(x, encoder_output, src_mask, tgt_mask)
    out = jax.block_until_ready(out)

    ref = _reference_forward(x, decoder.alpha, decoder.bias, decoder.eps)
    assert out.shape == (B, S, F)
    assert jnp.allclose(out, ref, atol=1e-5, rtol=1e-5), "mismatch vs reference"

    print("KERNEL_OK")
</pallas_src>

<mosaic_0001>
module attributes {stable_mosaic.version = 11 : i64} {
  func.func @_layernorm_kernel(%arg0: i32, %arg1: memref<8x128xf32, #tpu.memory_space<vmem>>, %arg2: memref<1x128xf32, #tpu.memory_space<vmem>>, %arg3: memref<1x128xf32, #tpu.memory_space<vmem>>, %arg4: memref<8x128xf32, #tpu.memory_space<vmem>>) attributes {dimension_semantics = [#tpu.dimension_semantics<parallel>], iteration_bounds = array<i64: 2>, scalar_prefetch = 0 : i64, scratch_operands = 0 : i64, tpu.core_type = #tpu.core_type<tc>, window_params = [{transform_indices = @transform_0, window_bounds = array<i64: 8, 128>}, {pipeline_mode = #tpu.pipeline_mode<synchronous>, transform_indices = @transform_1, window_bounds = array<i64: 1, 128>}, {pipeline_mode = #tpu.pipeline_mode<synchronous>, transform_indices = @transform_2, window_bounds = array<i64: 1, 128>}, {transform_indices = @transform_3, window_bounds = array<i64: 8, 128>}]} {
    %c0 = arith.constant 0 : index
    %c0_0 = arith.constant 0 : index
    %0 = vector.load %arg1[%c0, %c0_0] : memref<8x128xf32, #tpu.memory_space<vmem>>, vector<8x128xf32>
    %cst = arith.constant dense<0.000000e+00> : vector<8xf32>
    %1 = vector.multi_reduction <add>, %0, %cst [1] : vector<8x128xf32> to vector<8xf32>
    %2 = vector.shape_cast %1 : vector<8xf32> to vector<8x1xf32>
    %cst_1 = arith.constant 7.812500e-03 : f32
    %3 = vector.broadcast %cst_1 : f32 to vector<8x1xf32>
    %4 = arith.mulf %2, %3 : vector<8x1xf32>
    %5 = vector.broadcast %4 : vector<8x1xf32> to vector<8x128xf32>
    %6 = arith.subf %0, %5 : vector<8x128xf32>
    %7 = arith.mulf %6, %6 : vector<8x128xf32>
    %cst_2 = arith.constant dense<0.000000e+00> : vector<8xf32>
    %8 = vector.multi_reduction <add>, %7, %cst_2 [1] : vector<8x128xf32> to vector<8xf32>
    %9 = vector.shape_cast %8 : vector<8xf32> to vector<8x1xf32>
    %cst_3 = arith.constant 1.270000e+02 : f32
    %10 = vector.broadcast %cst_3 : f32 to vector<8x1xf32>
    %11 = arith.divf %9, %10 : vector<8x1xf32>
    %12 = math.sqrt %11 : vector<8x1xf32>
    %cst_4 = arith.constant 9.99999997E-7 : f32
    %13 = vector.broadcast %cst_4 : f32 to vector<8x1xf32>
    %14 = arith.addf %12, %13 : vector<8x1xf32>
    %15 = tpu.reciprocal %14 : vector<8x1xf32> -> vector<8x1xf32>
    %c0_5 = arith.constant 0 : index
    %c0_6 = arith.constant 0 : index
    %16 = vector.load %arg2[%c0_5, %c0_6] : memref<1x128xf32, #tpu.memory_space<vmem>>, vector<1x128xf32>
    %c0_7 = arith.constant 0 : index
    %c0_8 = arith.constant 0 : index
    %17 = vector.load %arg3[%c0_7, %c0_8] : memref<1x128xf32, #tpu.memory_space<vmem>>, vector<1x128xf32>
    %18 = vector.broadcast %15 : vector<8x1xf32> to vector<8x128xf32>
    %19 = arith.mulf %6, %18 : vector<8x128xf32>
    %20 = vector.broadcast %16 : vector<1x128xf32> to vector<8x128xf32>
    %21 = arith.mulf %20, %19 : vector<8x128xf32>
    %22 = vector.broadcast %17 : vector<1x128xf32> to vector<8x128xf32>
    %23 = arith.addf %21, %22 : vector<8x128xf32>
    %c0_9 = arith.constant 0 : index
    %c0_10 = arith.constant 0 : index
    %24 = vector.load %arg4[%c0_9, %c0_10] : memref<8x128xf32, #tpu.memory_space<vmem>>, vector<8x128xf32>
    tpu.vector_store %arg4[%c0_9, %c0_10], %23 {strides = array<i32>} : memref<8x128xf32, #tpu.memory_space<vmem>>, vector<8x128xf32>,
    return
  }
  func.func @transform_0(%arg0: i32) -> (i32, i32) {
    %c0_i32 = arith.constant 0 : i32
    %c0_i32_0 = arith.constant 0 : i32
    return %arg0, %c0_i32 : i32, i32
  }
  func.func @transform_1(%arg0: i32) -> (i32, i32) {
    %c0_i32 = arith.constant 0 : i32
    %c0_i32_0 = arith.constant 0 : i32
    %c0_i32_1 = arith.constant 0 : i32
    return %c0_i32, %c0_i32_0 : i32, i32
  }
  func.func @transform_2(%arg0: i32) -> (i32, i32) {
    %c0_i32 = arith.constant 0 : i32
    %c0_i32_0 = arith.constant 0 : i32
    %c0_i32_1 = arith.constant 0 : i32
    return %c0_i32, %c0_i32_0 : i32, i32
  }
  func.func @transform_3(%arg0: i32) -> (i32, i32) {
    %c0_i32 = arith.constant 0 : i32
    %c0_i32_0 = arith.constant 0 : i32
    return %arg0, %c0_i32 : i32, i32
  }
}

</mosaic_0001>

<llo_original>
// kernel: tpu_custom_call.1
$region0: #{tpu_custom_call.1}
  #allocation0 [shape = 'u32[]', space=smem, size = 0x4, offset = 0x4, fixed_abs, tag = 'smem constant byte address 0x4 - core index']
  #allocation1 [shape = 'u32[72,128]{1,0:T(1,128)}', space=vmem, size = 0x9000, scoped, tag = 'internal scratch']
  %s0 = inlined_call_operand.hbm [shape: f32[16,128], index: 0, kind: input, shape index: {}]
  %s1 = inlined_call_operand.hbm [shape: f32[1,128], index: 1, kind: input, shape index: {}]
  %s2 = inlined_call_operand.vmem [shape: f32[1,128], index: 2, kind: input, shape index: {}]
  %s3 = inlined_call_operand.hbm [shape: f32[16,128], index: 3, kind: output, shape index: {}]
  %s4 = sld [smem:[#allocation0]]
  $region53: #{tpu_custom_call.1} parent=0
    _
  %s6 = ssub.s32 1, %s4
  %s7 = scalar_select 0, %s6, %s4
  $region1: #{tpu_custom_call.1} parent=0
    #allocation2 [shape = 'u8[8192]{0}', space=vmem, size = 0x2000, scoped, tag = 'input window, operand 0']
    #allocation3 [shape = 's32[2]{0}', space=sflag, size = 0x8, scoped, tag = 'scoped memory for tpu_custom_call.1']
    #allocation4 [shape = 's32[2]{0}', space=sflag, size = 0x8, scoped, tag = 'scoped memory for tpu_custom_call.1']
    #allocation5 [shape = 'u8[512]{0}', space=vmem, size = 0x400, scoped, tag = 'input window, operand 1, single buffered']
    #allocation6 [shape = 's32[1]{0}', space=sflag, size = 0x4, scoped, tag = 'scoped memory for tpu_custom_call.1']
    #allocation7 [shape = 'u8[8192]{0}', space=vmem, size = 0x2000, scoped, tag = 'output window, operand 0']
    %8 = vsyncpa [#allocation3], 0
    %s9 = scalar_lea.sflag [#allocation3], 1
    %10 = vsyncpa %s9, 0
    %11 = vsyncpa [#allocation6], 0
    %12 = vsyncpa [#allocation4], 0
    %s13 = scalar_lea.sflag [#allocation4], 1
    %14 = vsyncpa %s13, 0
    loop: start=0, step=1, limit=4
    $region2: #{tpu_custom_call.1} parent=1 // loop_pre_header
      _
    $region3: #{tpu_custom_call.1} parent=1 // loop_header
      %s16 = sphi 0, %s20
      %p17 = scmp.ge.s32.totalorder %s16, 4
      %s26 = sphi 0, %s28
      %s29 = sphi 0, %s26
      %s30 = sphi 0, %s29
      %s46 = sphi 0, %s30
      %s50 = sphi 0, %s50
      %s52 = sphi 0, %s50
      %s53 = sphi 0, %s52
      %s67 = sphi 0, %s53
      %s71 = sphi 0, %s71
      %s73 = sphi 0, %s71
      %s74 = sphi 0, %s73
      %s88 = sphi 0, %s74
      %s94 = sphi 0, %s96
      %s97 = sphi 0, %s94
      %s98 = sphi 0, %s97
      %s114 = sphi 0, %s98
    $region4: #{tpu_custom_call.1} parent=1 // loop_header_branch
      %19 = sbr.rel (%p17) target = $region8
    $region5: #{tpu_custom_call.1} parent=1 // loop_body
      %s21 = ssub.s32 %s16, 1
      %s22 = ssub.s32 %s16, 2
      %s23 = sadd.s32 %s16, 1
      %s24 = ssub.s32 %s16, %s23
      %p25 = scmp.eq.s32.totalorder %s24, 0
      %s27 = sadd.s32 %s26, 1
      %s28 = scalar_select %p25, %s26, %s27
      %p31 = pneg %p25
      %p32 = scmp.eq.s32.totalorder %s16, 1
      %p33 = por %p31, %p32
      %p34 = scmp.ne.s32.totalorder %s26, %s29
      %p35 = scmp.eq.s32.totalorder %s16, 0
      %p36 = por %p34, %p35
      %p37 = scmp.ne.s32.totalorder %s26, %s29
      %p38 = scmp.eq.s32.totalorder %s21, 1
      %p39 = por %p37, %p38
      %p40 = scmp.ne.s32.totalorder %s29, %s30
      %p41 = scmp.eq.s32.totalorder %s21, 0
      %p42 = por %p40, %p41
      %p43 = scmp.ne.s32.totalorder %s29, %s30
      %p44 = scmp.eq.s32.totalorder %s22, 1
      %p45 = por %p43, %p44
      %p47 = scmp.ne.s32.totalorder %s30, %s46
      %p48 = scmp.eq.s32.totalorder %s22, 0
      %p49 = por %p47, %p48
      %s51 = sadd.s32 %s50, 1
      %p54 = scmp.eq.s32.totalorder %s16, 1
      %p55 = scmp.ne.s32.totalorder %s50, %s52
      %p56 = scmp.eq.s32.totalorder %s16, 0
      %p57 = por %p55, %p56
      %p58 = scmp.ne.s32.totalorder %s50, %s52
      %p59 = scmp.eq.s32.totalorder %s21, 1
      %p60 = por %p58, %p59
      %p61 = scmp.ne.s32.totalorder %s52, %s53
      %p62 = scmp.eq.s32.totalorder %s21, 0
      %p63 = por %p61, %p62
      %p64 = scmp.ne.s32.totalorder %s52, %s53
      %p65 = scmp.eq.s32.totalorder %s22, 1
      %p66 = por %p64, %p65
      %p68 = scmp.ne.s32.totalorder %s53, %s67
      %p69 = scmp.eq.s32.totalorder %s22, 0
      %p70 = por %p68, %p69
      %s72 = sadd.s32 %s71, 1
      %p75 = scmp.eq.s32.totalorder %s16, 1
      %p76 = scmp.ne.s32.totalorder %s71, %s73
      %p77 = scmp.eq.s32.totalorder %s16, 0
      %p78 = por %p76, %p77
      %p79 = scmp.ne.s32.totalorder %s71, %s73
      %p80 = scmp.eq.s32.totalorder %s21, 1
      %p81 = por %p79, %p80
      %p82 = scmp.ne.s32.totalorder %s73, %s74
      %p83 = scmp.eq.s32.totalorder %s21, 0
      %p84 = por %p82, %p83
      %p85 = scmp.ne.s32.totalorder %s73, %s74
      %p86 = scmp.eq.s32.totalorder %s22, 1
      %p87 = por %p85, %p86
      %p89 = scmp.ne.s32.totalorder %s74, %s88
      %p90 = scmp.eq.s32.totalorder %s22, 0
      %p91 = por %p89, %p90
      %s92 = ssub.s32 %s16, %s23
      %p93 = scmp.eq.s32.totalorder %s92, 0
      %s95 = sadd.s32 %s94, 1
      %s96 = scalar_select %p93, %s94, %s95
      %p99 = pneg %p93
      %p100 = scmp.eq.s32.totalorder %s16, 1
      %p101 = por %p99, %p100
      %p102 = scmp.ne.s32.totalorder %s94, %s97
      %p103 = scmp.eq.s32.totalorder %s16, 0
      %p104 = por %p102, %p103
      %p105 = scmp.ne.s32.totalorder %s94, %s97
      %p106 = scmp.eq.s32.totalorder %s21, 1
      %p107 = por %p105, %p106
      %p108 = scmp.ne.s32.totalorder %s97, %s98
      %p109 = scmp.eq.s32.totalorder %s21, 0
      %p110 = por %p108, %p109
      %p111 = scmp.ne.s32.totalorder %s97, %s98
      %p112 = scmp.eq.s32.totalorder %s22, 1
      %p113 = por %p111, %p112
      %p115 = scmp.ne.s32.totalorder %s98, %s114
      %p116 = scmp.eq.s32.totalorder %s22, 0
      %p117 = por %p115, %p116
      %p118 = scmp.le.s32.totalorder 1, %s16
      %p119 = scmp.lt.s32.totalorder %s16, 3
      %p120 = pnand %p118, %p119
      %p121 = pneg %p120
      // Predicated region
      $region9: #{tpu_custom_call.1} parent=5 // pred_check
        _
      $region10: #{tpu_custom_call.1} parent=5 // pred_check_branch
        %123 = sbr.rel (%p120) target = $region12
      $region11: #{tpu_custom_call.1} parent=5 // pred_region
        %s124 = ssub.s32 %s16, 1
        // Predicated region
        $region13: #{tpu_custom_call.1} parent=11 // pred_check
          %p125 = pneg %p63
        $region14: #{tpu_custom_call.1} parent=11 // pred_check_branch
          %127 = sbr.rel (%p125) target = $region16
        $region15: #{tpu_custom_call.1} parent=11 // pred_region
          %129 = vsyncadd [#allocation6], 0
          %s131 = sshll.u32 %s1, 4
          %s132 = int_to_ptr.hbm [resolvable:$true] %s131
          %s133 = sshll.u32 [#allocation5], 4
          %s134 = int_to_ptr.vmem [resolvable:$true] %s133
          %136 = dma.hbm_to_vmem [thread:$0]  %s132, 16, %s134, [#allocation6]
        $region16: #{tpu_custom_call.1} parent=11 // pred_fallthru
          _
        // Predicated region
        $region17: #{tpu_custom_call.1} parent=11 // pred_check
          %p137 = pneg %p84
        $region18: #{tpu_custom_call.1} parent=11 // pred_check_branch
          %139 = sbr.rel (%p137) target = $region20
        $region19: #{tpu_custom_call.1} parent=11 // pred_region
          _
        $region20: #{tpu_custom_call.1} parent=11 // pred_fallthru
          _
      $region12: #{tpu_custom_call.1} parent=5 // pred_fallthru
        _
      %p140 = scmp.lt.s32.totalorder %s16, 2
      // Predicated region
      $region21: #{tpu_custom_call.1} parent=5 // pred_check
        %p141 = pneg %p140
      $region22: #{tpu_custom_call.1} parent=5 // pred_check_branch
        %143 = sbr.rel (%p141) target = $region24
      $region23: #{tpu_custom_call.1} parent=5 // pred_region
        // Predicated region
        $region25: #{tpu_custom_call.1} parent=23 // pred_check
          %p144 = pneg %p36
        $region26: #{tpu_custom_call.1} parent=23 // pred_check_branch
          %146 = sbr.rel (%p144) target = $region28
        $region27: #{tpu_custom_call.1} parent=23 // pred_region
          %s147 = sand.u32 %s26, 1
          %s148 = scalar_lea.sflag [#allocation3], %s147
          %s149 = sand.u32 %s26, 1
          %s150 = smul.addr %s149, 8
          %s151 = scalar_lea.vmem [#allocation2], %s150
          %153 = vsyncadd %s148, 0
          %s154 = smul.addr %s16, 8
          %s155 = scalar_lea.hbm %s0, %s154
          %s157 = sshll.u32 %s155, 4
          %s158 = int_to_ptr.hbm [resolvable:$true] %s157
          %s159 = sshll.u32 %s151, 4
          %s160 = int_to_ptr.vmem [resolvable:$true] %s159
          %162 = dma.hbm_to_vmem [thread:$0]  %s158, 128, %s160, %s148
        $region28: #{tpu_custom_call.1} parent=23 // pred_fallthru
          _
      $region24: #{tpu_custom_call.1} parent=5 // pred_fallthru
        _
      %p163 = scmp.le.s32.totalorder 1, %s16
      %p164 = scmp.lt.s32.totalorder %s16, 3
      %p165 = pnand %p163, %p164
      %p166 = pneg %p165
      // Predicated region
      $region29: #{tpu_custom_call.1} parent=5 // pred_check
        _
      $region30: #{tpu_custom_call.1} parent=5 // pred_check_branch
        %168 = sbr.rel (%p165) target = $region32
      $region31: #{tpu_custom_call.1} parent=5 // pred_region
        %s169 = ssub.s32 %s16, 1
        %s170 = sand.u32 %s29, 1
        %s171 = scalar_lea.sflag [#allocation3], %s170
        %s172 = sand.u32 %s29, 1
        %s173 = smul.addr %s172, 8
        %s174 = scalar_lea.vmem [#allocation2], %s173
        // Predicated region
        $region33: #{tpu_custom_call.1} parent=31 // pred_check
          %p175 = pneg %p42
        $region34: #{tpu_custom_call.1} parent=31 // pred_check_branch
          %177 = sbr.rel (%p175) target = $region36
        $region35: #{tpu_custom_call.1} parent=31 // pred_region
          %179 = dma.done %s171, 128
        $region36: #{tpu_custom_call.1} parent=31 // pred_fallthru
          _
        // Predicated region
        $region37: #{tpu_custom_call.1} parent=31 // pred_check
          %p180 = pneg %p63
        $region38: #{tpu_custom_call.1} parent=31 // pred_check_branch
          %182 = sbr.rel (%p180) target = $region40
        $region39: #{tpu_custom_call.1} parent=31 // pred_region
          %184 = dma.done [#allocation6], 16
        $region40: #{tpu_custom_call.1} parent=31 // pred_fallthru
          _
        %s185 = sand.u32 %s29, 1
        %s186 = scalar_lea.sflag [#allocation3], %s185
        %s187 = sand.u32 %s29, 1
        %s188 = smul.addr %s187, 8
        %s189 = scalar_lea.vmem [#allocation2], %s188
        %p190 = pneg %p42
        %p191 = pneg %p39
        %p192 = pneg %p63
        %p193 = pneg %p60
        %p194 = pneg %p84
        %p195 = pneg %p81
        %p196 = pneg %p110
        %p197 = pneg %p107
        %s198 = sand.u32 %s97, 1
        %s199 = scalar_lea.sflag [#allocation4], %s198
        %s200 = sand.u32 %s97, 1
        %s201 = smul.addr %s200, 8
        %s202 = scalar_lea.vmem [#allocation7], %s201
        %v203 = vld [vmem:[%s174] sm:$0xff]
        %204 = vadd.xlane.f32.xlu0 %v203
        %v205 = vpop.xlane.xlu0 %204
        %v206 = vmul.f32 %v205, 0.0078125
        %v207 = vsub.f32 %v203, %v206
        %v208 = vmul.f32 %v207, %v207
        %209 = vadd.xlane.f32.xlu0 %v208
        %v210 = vpop.xlane.xlu0 %209
        %v211 = vrcp.pop 127.0
        %v212 = vmul.f32 127.0, %v211
        %v213 = vsub.f32 1.0, %v212
        %v214 = vmul.f32 %v211, %v213
        %v215 = vadd.f32 %v211, %v214
        %vm216 = vweird.f32 %v211
        %v217 = vsel %vm216, %v211, %v215
        %v218 = vmul.f32 %v210, %v217
        %v219 = vrsqrt.pop %v218
        %v220 = vmul.f32 %v219, %v218
        %v221 = vmul.f32 %v220, %v219
        %v222 = vmul.f32 0.5, %v221
        %v223 = vsub.f32 1.5, %v222
        %v224 = vmul.f32 %v219, %v223
        %v225 = vmul.f32 %v218, %v224
        %vm226 = vcmp.eq.f32.partialorder %v218, inf
        %v227 = vsel %vm226, %v218, %v225
        %vm228 = vcmp.eq.f32.partialorder %v218, 0.0
        %v229 = vand.u32 %v218, 2147483648
        %v230 = vsel %vm228, %v229, %v227
        %v231 = vadd.f32 %v230, 1e-06
        %v232 = vrcp.pop %v231
        %v233 = vmul.f32 %v231, %v232
        %v234 = vsub.f32 1.0, %v233
        %v235 = vmul.f32 %v232, %v234
        %v236 = vadd.f32 %v232, %v235
        %vm237 = vweird.f32 %v231
        %vm238 = vweird.f32 %v232
        %vm239 = vmor %vm237, %vm238
        %v240 = vsel %vm239, %v232, %v236
        %v241 = vand.u32 2147483647, %v231
        %vm242 = vcmp.eq.f32.partialorder %v241, 8.507059e+37
        %v243 = vand.u32 %v231, 2147483648
        %v244 = vor.u32 1.1754944e-38, %v243
        %v245 = vsel %vm242, %v244, %v240
        %v246 = vld [vmem:[#allocation5] sm:$0x1]
        %v247 = vld [vmem:[%s2] sm:$0x1]
        %v248 = vmul.f32 %v207, %v245
        %v250 = vperm.slane %v246, 0
        %v252 = vmul.f32 %v250, %v248
        %v254 = vperm.slane %v247, 0
        %v256 = vadd.f32 %v252, %v254
        %257 = vst [vmem:[%s202] sm:$0xff] %v256
        %s258 = sand.u32 %s97, 1
        %s259 = scalar_lea.sflag [#allocation4], %s258
        %s260 = sand.u32 %s97, 1
        %s261 = smul.addr %s260, 8
        %s262 = scalar_lea.vmem [#allocation7], %s261
        // Predicated region
        $region41: #{tpu_custom_call.1} parent=31 // pred_check
          %p263 = pneg %p107
        $region42: #{tpu_custom_call.1} parent=31 // pred_check_branch
          %265 = sbr.rel (%p263) target = $region44
        $region43: #{tpu_custom_call.1} parent=31 // pred_region
          %267 = vsyncadd %s259, 0
          %s268 = smul.addr %s21, 8
          %s269 = scalar_lea.hbm %s3, %s268
          %s271 = sshll.u32 %s262, 4
          %s272 = int_to_ptr.vmem [resolvable:$true] %s271
          %s273 = sshll.u32 %s269, 4
          %s274 = int_to_ptr.hbm [resolvable:$true] %s273
          %276 = dma.vmem_to_hbm [thread:$0]  %s272, 128, %s274, %s259
        $region44: #{tpu_custom_call.1} parent=31 // pred_fallthru
          _
      $region32: #{tpu_custom_call.1} parent=5 // pred_fallthru
        _
      %p277 = scmp.le.s32.totalorder 2, %s16
      // Predicated region
      $region45: #{tpu_custom_call.1} parent=5 // pred_check
        %p278 = pneg %p277
      $region46: #{tpu_custom_call.1} parent=5 // pred_check_branch
        %280 = sbr.rel (%p278) target = $region48
      $region47: #{tpu_custom_call.1} parent=5 // pred_region
        %s281 = ssub.s32 %s16, 2
        // Predicated region
        $region49: #{tpu_custom_call.1} parent=47 // pred_check
          %p282 = pneg %p113
        $region50: #{tpu_custom_call.1} parent=47 // pred_check_branch
          %284 = sbr.rel (%p282) target = $region52
        $region51: #{tpu_custom_call.1} parent=47 // pred_region
          %s285 = sand.u32 %s98, 1
          %s286 = scalar_lea.sflag [#allocation4], %s285
          %s287 = sand.u32 %s98, 1
          %s288 = smul.addr %s287, 8
          %s289 = scalar_lea.vmem [#allocation7], %s288
          %291 = dma.done %s286, 128
        $region52: #{tpu_custom_call.1} parent=47 // pred_fallthru
          _
      $region48: #{tpu_custom_call.1} parent=5 // pred_fallthru
        _
    $region6: #{tpu_custom_call.1} parent=1 // loop_footer
      %s20 = sadd.s32 1, %s16
    $region7: #{tpu_custom_call.1} parent=1 // loop_footer_branch
      %15 = sbr.rel target = $region3
    $region8: #{tpu_custom_call.1} parent=1 // loop_exit
      _
    %292 = vsyncpa [#allocation3], 1
    %s293 = scalar_lea.sflag [#allocation3], 1
    %294 = vsyncpa %s293, 1
    %295 = vsyncpa [#allocation6], 1
    %296 = vsyncpa [#allocation4], 1
    %s297 = scalar_lea.sflag [#allocation4], 1
    %298 = vsyncpa %s297, 1

</llo_original>
